<compile_context>
chip_gen: v7x
topology: tpu7x:2x2x1
jax: 0.10.0
libtpu: 0.0.40
codegen_flags: <defaults>
</compile_context>

<pallas_src>
import functools

import jax
import jax.numpy as jnp
from jax.experimental import pallas as pl
from jax.experimental.pallas import tpu as pltpu


def _round_up(x, m):
    return ((x + m - 1) // m) * m


# ----------------------------------------------------------------------------
# Fused Pallas kernel: whole MLP for one ensemble member / one batch tile.
# ----------------------------------------------------------------------------
def _fused_ensemble_mlp_kernel(*refs, n_layers):
    # refs = (x_ref, w0, b0, w1, b1, ..., w_{L-1}, b_{L-1}, out_ref)
    x_ref = refs[0]
    out_ref = refs[-1]
    wb = refs[1:-1]

    h = x_ref[...]                                        # (TB, D0) bf16
    for i in range(n_layers):
        w = wb[2 * i][...]                                # (D_i, D_{i+1}) bf16
        b = wb[2 * i + 1][...]                            # (1, D_{i+1}) f32
        y = jnp.dot(h, w, preferred_element_type=jnp.float32) + b
        if i < n_layers - 1:
            y = y * jax.nn.sigmoid(y)                     # SiLU (exp/recip -> EUP)
            h = y.astype(jnp.bfloat16)                    # bf16 feed to next MXU op
        else:
            h = y                                         # linear Gaussian head
    out_ref[...] = h.astype(out_ref.dtype)


def ensemble_mlp_forward(params, x, *, batch_tile=512):
    """params: list of (w:(E,Din,Dout) f32, b:(E,1,Dout) f32); x:(B, Din) f32.

    Returns (E, B, Dout_last) f32.  The ensemble broadcast of x is never
    materialized; all layers run inside one pallas_call.
    """
    E = params[0][0].shape[0]
    B, din = x.shape
    dims = [din] + [w.shape[-1] for (w, _) in params]
    dims_p = [_round_up(d, 128) for d in dims]            # lane-dense feature dims
    n_layers = len(params)

    # Batch tiling: biggest multiple-of-8 tile up to `batch_tile` (VMEM-safe
    # on all generations incl. v7x's 64 MiB physical / 32 MiB scoped VMEM).
    b_pad = _round_up(B, 8)
    tb = min(b_pad, _round_up(batch_tile, 8))
    b_pad = _round_up(b_pad, tb)
    nb = b_pad // tb

    # Pad + cast inputs once in the wrapper (zeros in padded rows/cols keep
    # the math exact; padded hidden units stay exactly 0 through SiLU).
    x_p = jnp.zeros((b_pad, dims_p[0]), jnp.bfloat16).at[:B, :din].set(
        x.astype(jnp.bfloat16))

    wb_args = []
    wb_specs = []
    for i, (w, b) in enumerate(params):
        di, do = dims[i], dims[i + 1]
        dip, dop = dims_p[i], dims_p[i + 1]
        w_p = jnp.zeros((E, dip, dop), jnp.bfloat16).at[:, :di, :do].set(
            w.astype(jnp.bfloat16))
        b_p = jnp.zeros((E, 1, dop), jnp.float32).at[:, :, :do].set(b)
        wb_args += [w_p, b_p]
        wb_specs += [
            pl.BlockSpec((pl.Squeezed(), dip, dop), lambda bi, e: (e, 0, 0)),
            pl.BlockSpec((pl.Squeezed(), 1, dop), lambda bi, e: (e, 0, 0)),
        ]

    kernel = functools.partial(_fused_ensemble_mlp_kernel, n_layers=n_layers)
    out = pl.pallas_call(
        kernel,
        out_shape=jax.ShapeDtypeStruct((E, b_pad, dims_p[-1]), jnp.float32),
        grid=(nb, E),
        in_specs=[
            # x is shared across ensemble members: same block for every e.
            pl.BlockSpec((tb, dims_p[0]), lambda bi, e: (bi, 0)),
        ] + wb_specs,
        out_specs=pl.BlockSpec(
            (pl.Squeezed(), tb, dims_p[-1]), lambda bi, e: (e, bi, 0)),
        compiler_params=pltpu.CompilerParams(
            dimension_semantics=("parallel", "parallel")),
    )(x_p, *wb_args)

    return out[:, :B, :dims[-1]]


# ----------------------------------------------------------------------------
# Parameter construction (deterministic, synthetic — no checkpoint load)
# ----------------------------------------------------------------------------
def init_params(key, in_dim, hidden_dims, out_dim, ensemble_size):
    """Ensemble MLP: in_dim -> hidden_dims... -> 2*out_dim (mean, log_std)."""
    dims = [in_dim] + list(hidden_dims) + [2 * out_dim]
    layers = []
    for i in range(len(dims) - 1):
        key, kw, kb = jax.random.split(key, 3)
        fan_in = dims[i]
        scale = 1.0 / jnp.sqrt(jnp.float32(fan_in))
        w = scale * jax.random.normal(
            kw, (ensemble_size, dims[i], dims[i + 1]), dtype=jnp.float32)
        b = 0.01 * jax.random.normal(
            kb, (ensemble_size, 1, dims[i + 1]), dtype=jnp.float32)
        layers.append((w, b))
    return layers


# ----------------------------------------------------------------------------
# Forward pass (matches EnsembleTransitionRewardModel.forward semantics)
# ----------------------------------------------------------------------------
def ensemble_transition_reward_forward(
    params, obs, act, key, *, deterministic=False, reduction="rand",
):
    # x = cat(obs, act, -1); ensemble broadcast handled inside the kernel.
    x = jnp.concatenate([obs, act], axis=-1)              # (B, obs+act)

    # self.scaler is None (normalize=False)

    # Fused EnsembleGaussianMLP: hidden layers with SiLU, linear output head.
    h = ensemble_mlp_forward(params, x)                   # (E, B, 2*(obs+1))

    # Gaussian head: split into mean / log_std, sample (or take mean).
    # TODO(synk): EnsembleGaussianMLP source not provided; assumes a standard
    # mean/log_std head without learned log-variance min/max clamping.
    mean, log_std = jnp.split(h, 2, axis=-1)              # each (E, B, obs+1)
    if deterministic:
        ens_preds = mean
    else:
        key, k_noise = jax.random.split(key)
        ens_preds = mean + jnp.exp(log_std) * jax.random.normal(
            k_noise, mean.shape, dtype=mean.dtype)

    if reduction == "mean":
        preds = jnp.mean(ens_preds, axis=0)               # (B, obs+1)
    elif reduction == "rand":
        E, B = ens_preds.shape[:2]
        key, k_idx = jax.random.split(key)
        model_inds = jax.random.randint(k_idx, (B,), 0, E)
        preds = ens_preds[model_inds, jnp.arange(B)]      # (B, obs+1)
    else:
        raise ValueError("Unsupported reduction")

    rew = preds[:, :1]                                    # (B, 1)
    next_obs = preds[:, 1:] + obs                         # (B, obs_dim)
    return next_obs, rew


# ----------------------------------------------------------------------------
# Demo / smoke test
# ----------------------------------------------------------------------------
if __name__ == "__main__":
    obs_dim = 16
    act_dim = 4
    hidden_dims = (32, 32)
    ensemble_size = 4
    batch = 8

    root = jax.random.PRNGKey(0)
    k_params, k_obs, k_act, k_fwd = jax.random.split(root, 4)

    params = init_params(
        k_params, obs_dim + act_dim, hidden_dims, obs_dim + 1, ensemble_size)

    obs = jax.random.normal(k_obs, (batch, obs_dim), dtype=jnp.float32)
    act = jax.random.normal(k_act, (batch, act_dim), dtype=jnp.float32)

    next_obs, rew = ensemble_transition_reward_forward(
        params, obs, act, k_fwd,
        deterministic=False,
        reduction="rand",
    )
    jax.block_until_ready((next_obs, rew))

    assert next_obs.shape == (batch, obs_dim)
    assert rew.shape == (batch, 1)
    assert jnp.all(jnp.isfinite(next_obs)) and jnp.all(jnp.isfinite(rew))

    print("KERNEL_OK")
</pallas_src>

<mosaic_0001>
module attributes {stable_mosaic.version = 11 : i64} {
  func.func @_fused_ensemble_mlp_kernel(%arg0: i32, %arg1: i32, %arg2: memref<8x128xbf16, #tpu.memory_space<vmem>>, %arg3: memref<1x128x128xbf16, #tpu.memory_space<vmem>>, %arg4: memref<1x1x128xf32, #tpu.memory_space<vmem>>, %arg5: memref<1x128x128xbf16, #tpu.memory_space<vmem>>, %arg6: memref<1x1x128xf32, #tpu.memory_space<vmem>>, %arg7: memref<1x128x128xbf16, #tpu.memory_space<vmem>>, %arg8: memref<1x1x128xf32, #tpu.memory_space<vmem>>, %arg9: memref<1x8x128xf32, #tpu.memory_space<vmem>>) attributes {dimension_semantics = [#tpu.dimension_semantics<parallel>, #tpu.dimension_semantics<parallel>], iteration_bounds = array<i64: 1, 4>, scalar_prefetch = 0 : i64, scratch_operands = 0 : i64, tpu.core_type = #tpu.core_type<tc>, window_params = [{transform_indices = @transform_0, window_bounds = array<i64: 8, 128>}, {transform_indices = @transform_1, window_bounds = array<i64: 1, 128, 128>}, {transform_indices = @transform_2, window_bounds = array<i64: 1, 1, 128>}, {transform_indices = @transform_3, window_bounds = array<i64: 1, 128, 128>}, {transform_indices = @transform_4, window_bounds = array<i64: 1, 1, 128>}, {transform_indices = @transform_5, window_bounds = array<i64: 1, 128, 128>}, {transform_indices = @transform_6, window_bounds = array<i64: 1, 1, 128>}, {transform_indices = @transform_7, window_bounds = array<i64: 1, 8, 128>}]} {
    %c0 = arith.constant 0 : index
    %c0_0 = arith.constant 0 : index
    %0 = vector.load %arg2[%c0, %c0_0] : memref<8x128xbf16, #tpu.memory_space<vmem>>, vector<8x128xbf16>
    %c0_1 = arith.constant 0 : index
    %c0_2 = arith.constant 0 : index
    %c0_3 = arith.constant 0 : index
    %1 = vector.load %arg3[%c0_1, %c0_2, %c0_3] : memref<1x128x128xbf16, #tpu.memory_space<vmem>>, vector<1x128x128xbf16>
    %2 = vector.shape_cast %1 : vector<1x128x128xbf16> to vector<128x128xbf16>
    %c0_4 = arith.constant 0 : index
    %c0_5 = arith.constant 0 : index
    %c0_6 = arith.constant 0 : index
    %3 = vector.load %arg4[%c0_4, %c0_5, %c0_6] : memref<1x1x128xf32, #tpu.memory_space<vmem>>, vector<1x1x128xf32>
    %4 = vector.shape_cast %3 : vector<1x1x128xf32> to vector<1x128xf32>
    %cst = arith.constant dense<0.000000e+00> : vector<8x128xf32>
    %5 = tpu.matmul %0, %2, %cst {dimension_numbers = #tpu.dot_dimension_numbers<[1], [0], [0], [1], [0, 0, 1, 1], [], []>} : vector<8x128xbf16>, vector<128x128xbf16>, vector<8x128xf32> -> vector<8x128xf32>
    %6 = vector.broadcast %4 : vector<1x128xf32> to vector<8x128xf32>
    %7 = arith.addf %5, %6 : vector<8x128xf32>
    %8 = arith.negf %7 : vector<8x128xf32>
    %9 = math.exp %8 : vector<8x128xf32>
    %cst_7 = arith.constant 1.000000e+00 : f32
    %10 = vector.broadcast %cst_7 : f32 to vector<8x128xf32>
    %11 = arith.addf %10, %9 : vector<8x128xf32>
    %12 = arith.divf %10, %11 : vector<8x128xf32>
    %13 = arith.mulf %7, %12 : vector<8x128xf32>
    %14 = arith.truncf %13 : vector<8x128xf32> to vector<8x128xbf16>
    %c0_8 = arith.constant 0 : index
    %c0_9 = arith.constant 0 : index
    %c0_10 = arith.constant 0 : index
    %15 = vector.load %arg5[%c0_8, %c0_9, %c0_10] : memref<1x128x128xbf16, #tpu.memory_space<vmem>>, vector<1x128x128xbf16>
    %16 = vector.shape_cast %15 : vector<1x128x128xbf16> to vector<128x128xbf16>
    %c0_11 = arith.constant 0 : index
    %c0_12 = arith.constant 0 : index
    %c0_13 = arith.constant 0 : index
    %17 = vector.load %arg6[%c0_11, %c0_12, %c0_13] : memref<1x1x128xf32, #tpu.memory_space<vmem>>, vector<1x1x128xf32>
    %18 = vector.shape_cast %17 : vector<1x1x128xf32> to vector<1x128xf32>
    %cst_14 = arith.constant dense<0.000000e+00> : vector<8x128xf32>
    %19 = tpu.matmul %14, %16, %cst_14 {dimension_numbers = #tpu.dot_dimension_numbers<[1], [0], [0], [1], [0, 0, 1, 1], [], []>} : vector<8x128xbf16>, vector<128x128xbf16>, vector<8x128xf32> -> vector<8x128xf32>
    %20 = vector.broadcast %18 : vector<1x128xf32> to vector<8x128xf32>
    %21 = arith.addf %19, %20 : vector<8x128xf32>
    %22 = arith.negf %21 : vector<8x128xf32>
    %23 = math.exp %22 : vector<8x128xf32>
    %cst_15 = arith.constant 1.000000e+00 : f32
    %24 = vector.broadcast %cst_15 : f32 to vector<8x128xf32>
    %25 = arith.addf %24, %23 : vector<8x128xf32>
    %26 = arith.divf %24, %25 : vector<8x128xf32>
    %27 = arith.mulf %21, %26 : vector<8x128xf32>
    %28 = arith.truncf %27 : vector<8x128xf32> to vector<8x128xbf16>
    %c0_16 = arith.constant 0 : index
    %c0_17 = arith.constant 0 : index
    %c0_18 = arith.constant 0 : index
    %29 = vector.load %arg7[%c0_16, %c0_17, %c0_18] : memref<1x128x128xbf16, #tpu.memory_space<vmem>>, vector<1x128x128xbf16>
    %30 = vector.shape_cast %29 : vector<1x128x128xbf16> to vector<128x128xbf16>
    %c0_19 = arith.constant 0 : index
    %c0_20 = arith.constant 0 : index
    %c0_21 = arith.constant 0 : index
    %31 = vector.load %arg8[%c0_19, %c0_20, %c0_21] : memref<1x1x128xf32, #tpu.memory_space<vmem>>, vector<1x1x128xf32>
    %32 = vector.shape_cast %31 : vector<1x1x128xf32> to vector<1x128xf32>
    %cst_22 = arith.constant dense<0.000000e+00> : vector<8x128xf32>
    %33 = tpu.matmul %28, %30, %cst_22 {dimension_numbers = #tpu.dot_dimension_numbers<[1], [0], [0], [1], [0, 0, 1, 1], [], []>} : vector<8x128xbf16>, vector<128x128xbf16>, vector<8x128xf32> -> vector<8x128xf32>
    %34 = vector.broadcast %32 : vector<1x128xf32> to vector<8x128xf32>
    %35 = arith.addf %33, %34 : vector<8x128xf32>
    %c0_23 = arith.constant 0 : index
    %c0_24 = arith.constant 0 : index
    %c0_25 = arith.constant 0 : index
    %36 = vector.load %arg9[%c0_23, %c0_24, %c0_25] : memref<1x8x128xf32, #tpu.memory_space<vmem>>, vector<1x8x128xf32>
    %37 = vector.shape_cast %36 : vector<1x8x128xf32> to vector<8x128xf32>
    %38 = vector.shape_cast %35 : vector<8x128xf32> to vector<1x8x128xf32>
    tpu.vector_store %arg9[%c0_23, %c0_24, %c0_25], %38 {strides = array<i32>} : memref<1x8x128xf32, #tpu.memory_space<vmem>>, vector<1x8x128xf32>,
    return
  }
  func.func @transform_0(%arg0: i32, %arg1: i32) -> (i32, i32) {
    %c0_i32 = arith.constant 0 : i32
    %c0_i32_0 = arith.constant 0 : i32
    return %arg0, %c0_i32 : i32, i32
  }
  func.func @transform_1(%arg0: i32, %arg1: i32) -> (i32, i32, i32) {
    %c0_i32 = arith.constant 0 : i32
    %c0_i32_0 = arith.constant 0 : i32
    %c0_i32_1 = arith.constant 0 : i32
    return %arg1, %c0_i32, %c0_i32_0 : i32, i32, i32
  }
  func.func @transform_2(%arg0: i32, %arg1: i32) -> (i32, i32, i32) {
    %c0_i32 = arith.constant 0 : i32
    %c0_i32_0 = arith.constant 0 : i32
    %c0_i32_1 = arith.constant 0 : i32
    return %arg1, %c0_i32, %c0_i32_0 : i32, i32, i32
  }
  func.func @transform_3(%arg0: i32, %arg1: i32) -> (i32, i32, i32) {
    %c0_i32 = arith.constant 0 : i32
    %c0_i32_0 = arith.constant 0 : i32
    %c0_i32_1 = arith.constant 0 : i32
    return %arg1, %c0_i32, %c0_i32_0 : i32, i32, i32
  }
  func.func @transform_4(%arg0: i32, %arg1: i32) -> (i32, i32, i32) {
    %c0_i32 = arith.constant 0 : i32
    %c0_i32_0 = arith.constant 0 : i32
    %c0_i32_1 = arith.constant 0 : i32
    return %arg1, %c0_i32, %c0_i32_0 : i32, i32, i32
  }
  func.func @transform_5(%arg0: i32, %arg1: i32) -> (i32, i32, i32) {
    %c0_i32 = arith.constant 0 : i32
    %c0_i32_0 = arith.constant 0 : i32
    %c0_i32_1 = arith.constant 0 : i32
    return %arg1, %c0_i32, %c0_i32_0 : i32, i32, i32
  }
  func.func @transform_6(%arg0: i32, %arg1: i32) -> (i32, i32, i32) {
    %c0_i32 = arith.constant 0 : i32
    %c0_i32_0 = arith.constant 0 : i32
    %c0_i32_1 = arith.constant 0 : i32
    return %arg1, %c0_i32, %c0_i32_0 : i32, i32, i32
  }
  func.func @transform_7(%arg0: i32, %arg1: i32) -> (i32, i32, i32) {
    %c0_i32 = arith.constant 0 : i32
    %c0_i32_0 = arith.constant 0 : i32
    return %arg1, %arg0, %c0_i32 : i32, i32, i32
  }
}

</mosaic_0001>

<llo_original>
// kernel: tpu_custom_call.1
$region0: #{tpu_custom_call.1}
  #allocation0 [shape = 'u32[]', space=smem, size = 0x4, offset = 0x4, fixed_abs, tag = 'smem constant byte address 0x4 - core index']
  #allocation1 [shape = 'u32[144,128]{1,0:T(1,128)}', space=vmem, size = 0x12000, scoped, tag = 'internal scratch']
  %s0 = inlined_call_operand.hbm [shape: bf16[8,128], index: 0, kind: input, shape index: {}]
  %s1 = inlined_call_operand.hbm [shape: bf16[4,128,128], index: 1, kind: input, shape index: {}]
  %s2 = inlined_call_operand.vmem [shape: f32[4,1,128], index: 2, kind: input, shape index: {}]
  %s3 = inlined_call_operand.hbm [shape: bf16[4,128,128], index: 3, kind: input, shape index: {}]
  %s4 = inlined_call_operand.vmem [shape: f32[4,1,128], index: 4, kind: input, shape index: {}]
  %s5 = inlined_call_operand.hbm [shape: bf16[4,128,128], index: 5, kind: input, shape index: {}]
  %s6 = inlined_call_operand.vmem [shape: f32[4,1,128], index: 6, kind: input, shape index: {}]
  %s7 = inlined_call_operand.hbm [shape: f32[4,8,128], index: 7, kind: output, shape index: {}]
  %s8 = sld [smem:[#allocation0]]
  $region77: #{tpu_custom_call.1} parent=0
    _
  %s10 = ssub.s32 1, %s8
  %s11 = scalar_select 0, %s10, %s8
  $region1: #{tpu_custom_call.1} parent=0
    #allocation2 [shape = 'u8[2048]{0}', space=vmem, size = 0x800, scoped, tag = 'input window, operand 0, single buffered']
    #allocation3 [shape = 's32[2]{0}', space=sflag, size = 0x8, scoped, tag = 'scoped memory for tpu_custom_call.1']
    #allocation4 [shape = 's32[2]{0}', space=sflag, size = 0x8, scoped, tag = 'scoped memory for tpu_custom_call.1']
    #allocation5 [shape = 'u8[65536]{0}', space=vmem, size = 0x10000, scoped, tag = 'input window, operand 1']
    #allocation6 [shape = 's32[2]{0}', space=sflag, size = 0x8, scoped, tag = 'scoped memory for tpu_custom_call.1']
    #allocation7 [shape = 'u8[65536]{0}', space=vmem, size = 0x10000, scoped, tag = 'input window, operand 3']
    #allocation8 [shape = 'u8[65536]{0}', space=vmem, size = 0x10000, scoped, tag = 'input window, operand 5']
    #allocation9 [shape = 's32[2]{0}', space=sflag, size = 0x8, scoped, tag = 'scoped memory for tpu_custom_call.1']
    #allocation10 [shape = 'u8[8192]{0}', space=vmem, size = 0x2000, scoped, tag = 'output window, operand 0']
    %12 = vsyncpa [#allocation3], 0
    %13 = vsyncpa [#allocation6], 0
    %s14 = scalar_lea.sflag [#allocation6], 1
    %15 = vsyncpa %s14, 0
    %16 = vsyncpa [#allocation9], 0
    %s17 = scalar_lea.sflag [#allocation9], 1
    %18 = vsyncpa %s17, 0
    %19 = vsyncpa [#allocation4], 0
    %s20 = scalar_lea.sflag [#allocation4], 1
    %21 = vsyncpa %s20, 0
    loop: start=0, step=1, limit=6
    $region2: #{tpu_custom_call.1} parent=1 // loop_pre_header
      _
    $region3: #{tpu_custom_call.1} parent=1 // loop_header
      %s23 = sphi 0, %s27
      %p24 = scmp.ge.s32.totalorder %s23, 6
      %s30 = sphi 0, %s42
      %s31 = sphi 0, %s38
      %s32 = sphi 0, %s30
      %s33 = sphi 0, %s31
      %s34 = sphi 0, %s32
      %s35 = sphi 0, %s33
      %s45 = sphi 0, %s47
      %s48 = sphi 0, %s45
      %s49 = sphi 0, %s48
      %s65 = sphi 0, %s49
      %s71 = sphi 0, %s73
      %s74 = sphi 0, %s71
      %s75 = sphi 0, %s74
      %s91 = sphi 0, %s75
      %s97 = sphi 0, %s99
      %s100 = sphi 0, %s97
      %s101 = sphi 0, %s100
      %s117 = sphi 0, %s101
      %s123 = sphi 0, %s125
      %s126 = sphi 0, %s123
      %s127 = sphi 0, %s126
      %s143 = sphi 0, %s127
      %s149 = sphi 0, %s151
      %s152 = sphi 0, %s149
      %s153 = sphi 0, %s152
      %s169 = sphi 0, %s153
      %s175 = sphi 0, %s177
      %s178 = sphi 0, %s175
      %s179 = sphi 0, %s178
      %s195 = sphi 0, %s179
      %s201 = sphi 0, %s203
      %s204 = sphi 0, %s201
      %s205 = sphi 0, %s204
      %s221 = sphi 0, %s205
      %s229 = sphi 0, %s231
      %s232 = sphi 0, %s229
      %s233 = sphi 0, %s232
      %s249 = sphi 0, %s233
    $region4: #{tpu_custom_call.1} parent=1 // loop_header_branch
      %26 = sbr.rel (%p24) target = $region8
    $region5: #{tpu_custom_call.1} parent=1 // loop_body
      %s28 = ssub.s32 %s23, 1
      %s29 = ssub.s32 %s23, 2
      %s36 = sadd.s32 1, %s31
      %p37 = scmp.ge.s32.totalorder %s36, 4
      %s38 = scalar_select %p37, 0, %s36
      %s39 = sadd.s32 1, %s30
      %s40 = scalar_select %p37, %s39, %s30
      %p41 = scmp.ge.s32.totalorder %s40, 1
      %s42 = scalar_select %p41, 0, %s40
      %s43 = ssub.s32 %s30, %s42
      %p44 = scmp.eq.s32.totalorder %s43, 0
      %s46 = sadd.s32 %s45, 1
      %s47 = scalar_select %p44, %s45, %s46
      %p50 = pneg %p44
      %p51 = scmp.eq.s32.totalorder %s23, 3
      %p52 = por %p50, %p51
      %p53 = scmp.ne.s32.totalorder %s45, %s48
      %p54 = scmp.eq.s32.totalorder %s23, 0
      %p55 = por %p53, %p54
      %p56 = scmp.ne.s32.totalorder %s45, %s48
      %p57 = scmp.eq.s32.totalorder %s28, 3
      %p58 = por %p56, %p57
      %p59 = scmp.ne.s32.totalorder %s48, %s49
      %p60 = scmp.eq.s32.totalorder %s28, 0
      %p61 = por %p59, %p60
      %p62 = scmp.ne.s32.totalorder %s48, %s49
      %p63 = scmp.eq.s32.totalorder %s29, 3
      %p64 = por %p62, %p63
      %p66 = scmp.ne.s32.totalorder %s49, %s65
      %p67 = scmp.eq.s32.totalorder %s29, 0
      %p68 = por %p66, %p67
      %s69 = ssub.s32 %s31, %s38
      %p70 = scmp.eq.s32.totalorder %s69, 0
      %s72 = sadd.s32 %s71, 1
      %s73 = scalar_select %p70, %s71, %s72
      %p76 = pneg %p70
      %p77 = scmp.eq.s32.totalorder %s23, 3
      %p78 = por %p76, %p77
      %p79 = scmp.ne.s32.totalorder %s71, %s74
      %p80 = scmp.eq.s32.totalorder %s23, 0
      %p81 = por %p79, %p80
      %p82 = scmp.ne.s32.totalorder %s71, %s74
      %p83 = scmp.eq.s32.totalorder %s28, 3
      %p84 = por %p82, %p83
      %p85 = scmp.ne.s32.totalorder %s74, %s75
      %p86 = scmp.eq.s32.totalorder %s28, 0
      %p87 = por %p85, %p86
      %p88 = scmp.ne.s32.totalorder %s74, %s75
      %p89 = scmp.eq.s32.totalorder %s29, 3
      %p90 = por %p88, %p89
      %p92 = scmp.ne.s32.totalorder %s75, %s91
      %p93 = scmp.eq.s32.totalorder %s29, 0
      %p94 = por %p92, %p93
      %s95 = ssub.s32 %s31, %s38
      %p96 = scmp.eq.s32.totalorder %s95, 0
      %s98 = sadd.s32 %s97, 1
      %s99 = scalar_select %p96, %s97, %s98
      %p102 = pneg %p96
      %p103 = scmp.eq.s32.totalorder %s23, 3
      %p104 = por %p102, %p103
      %p105 = scmp.ne.s32.totalorder %s97, %s100
      %p106 = scmp.eq.s32.totalorder %s23, 0
      %p107 = por %p105, %p106
      %p108 = scmp.ne.s32.totalorder %s97, %s100
      %p109 = scmp.eq.s32.totalorder %s28, 3
      %p110 = por %p108, %p109
      %p111 = scmp.ne.s32.totalorder %s100, %s101
      %p112 = scmp.eq.s32.totalorder %s28, 0
      %p113 = por %p111, %p112
      %p114 = scmp.ne.s32.totalorder %s100, %s101
      %p115 = scmp.eq.s32.totalorder %s29, 3
      %p116 = por %p114, %p115
      %p118 = scmp.ne.s32.totalorder %s101, %s117
      %p119 = scmp.eq.s32.totalorder %s29, 0
      %p120 = por %p118, %p119
      %s121 = ssub.s32 %s31, %s38
      %p122 = scmp.eq.s32.totalorder %s121, 0
      %s124 = sadd.s32 %s123, 1
      %s125 = scalar_select %p122, %s123, %s124
      %p128 = pneg %p122
      %p129 = scmp.eq.s32.totalorder %s23, 3
      %p130 = por %p128, %p129
      %p131 = scmp.ne.s32.totalorder %s123, %s126
      %p132 = scmp.eq.s32.totalorder %s23, 0
      %p133 = por %p131, %p132
      %p134 = scmp.ne.s32.totalorder %s123, %s126
      %p135 = scmp.eq.s32.totalorder %s28, 3
      %p136 = por %p134, %p135
      %p137 = scmp.ne.s32.totalorder %s126, %s127
      %p138 = scmp.eq.s32.totalorder %s28, 0
      %p139 = por %p137, %p138
      %p140 = scmp.ne.s32.totalorder %s126, %s127
      %p141 = scmp.eq.s32.totalorder %s29, 3
      %p142 = por %p140, %p141
      %p144 = scmp.ne.s32.totalorder %s127, %s143
      %p145 = scmp.eq.s32.totalorder %s29, 0
      %p146 = por %p144, %p145
      %s147 = ssub.s32 %s31, %s38
      %p148 = scmp.eq.s32.totalorder %s147, 0
      %s150 = sadd.s32 %s149, 1
      %s151 = scalar_select %p148, %s149, %s150
      %p154 = pneg %p148
      %p155 = scmp.eq.s32.totalorder %s23, 3
      %p156 = por %p154, %p155
      %p157 = scmp.ne.s32.totalorder %s149, %s152
      %p158 = scmp.eq.s32.totalorder %s23, 0
      %p159 = por %p157, %p158
      %p160 = scmp.ne.s32.totalorder %s149, %s152
      %p161 = scmp.eq.s32.totalorder %s28, 3
      %p162 = por %p160, %p161
      %p163 = scmp.ne.s32.totalorder %s152, %s153
      %p164 = scmp.eq.s32.totalorder %s28, 0
      %p165 = por %p163, %p164
      %p166 = scmp.ne.s32.totalorder %s152, %s153
      %p167 = scmp.eq.s32.totalorder %s29, 3
      %p168 = por %p166, %p167
      %p170 = scmp.ne.s32.totalorder %s153, %s169
      %p171 = scmp.eq.s32.totalorder %s29, 0
      %p172 = por %p170, %p171
      %s173 = ssub.s32 %s31, %s38
      %p174 = scmp.eq.s32.totalorder %s173, 0
      %s176 = sadd.s32 %s175, 1
      %s177 = scalar_select %p174, %s175, %s176
      %p180 = pneg %p174
      %p181 = scmp.eq.s32.totalorder %s23, 3
      %p182 = por %p180, %p181
      %p183 = scmp.ne.s32.totalorder %s175, %s178
      %p184 = scmp.eq.s32.totalorder %s23, 0
      %p185 = por %p183, %p184
      %p186 = scmp.ne.s32.totalorder %s175, %s178
      %p187 = scmp.eq.s32.totalorder %s28, 3
      %p188 = por %p186, %p187
      %p189 = scmp.ne.s32.totalorder %s178, %s179
      %p190 = scmp.eq.s32.totalorder %s28, 0
      %p191 = por %p189, %p190
      %p192 = scmp.ne.s32.totalorder %s178, %s179
      %p193 = scmp.eq.s32.totalorder %s29, 3
      %p194 = por %p192, %p193
      %p196 = scmp.ne.s32.totalorder %s179, %s195
      %p197 = scmp.eq.s32.totalorder %s29, 0
      %p198 = por %p196, %p197
      %s199 = ssub.s32 %s31, %s38
      %p200 = scmp.eq.s32.totalorder %s199, 0
      %s202 = sadd.s32 %s201, 1
      %s203 = scalar_select %p200, %s201, %s202
      %p206 = pneg %p200
      %p207 = scmp.eq.s32.totalorder %s23, 3
      %p208 = por %p206, %p207
      %p209 = scmp.ne.s32.totalorder %s201, %s204
      %p210 = scmp.eq.s32.totalorder %s23, 0
      %p211 = por %p209, %p210
      %p212 = scmp.ne.s32.totalorder %s201, %s204
      %p213 = scmp.eq.s32.totalorder %s28, 3
      %p214 = por %p212, %p213
      %p215 = scmp.ne.s32.totalorder %s204, %s205
      %p216 = scmp.eq.s32.totalorder %s28, 0
      %p217 = por %p215, %p216
      %p218 = scmp.ne.s32.totalorder %s204, %s205
      %p219 = scmp.eq.s32.totalorder %s29, 3
      %p220 = por %p218, %p219
      %p222 = scmp.ne.s32.totalorder %s205, %s221
      %p223 = scmp.eq.s32.totalorder %s29, 0
      %p224 = por %p222, %p223
      %s225 = ssub.s32 %s31, %s38
      %s226 = ssub.s32 %s30, %s42
      %s227 = sor.u32 %s225, %s226
      %p228 = scmp.eq.s32.totalorder %s227, 0
      %s230 = sadd.s32 %s229, 1
      %s231 = scalar_select %p228, %s229, %s230
      %p234 = pneg %p228
      %p235 = scmp.eq.s32.totalorder %s23, 3
      %p236 = por %p234, %p235
      %p237 = scmp.ne.s32.totalorder %s229, %s232
      %p238 = scmp.eq.s32.totalorder %s23, 0
      %p239 = por %p237, %p238
      %p240 = scmp.ne.s32.totalorder %s229, %s232
      %p241 = scmp.eq.s32.totalorder %s28, 3
      %p242 = por %p240, %p241
      %p243 = scmp.ne.s32.totalorder %s232, %s233
      %p244 = scmp.eq.s32.totalorder %s28, 0
      %p245 = por %p243, %p244
      %p246 = scmp.ne.s32.totalorder %s232, %s233
      %p247 = scmp.eq.s32.totalorder %s29, 3
      %p248 = por %p246, %p247
      %p250 = scmp.ne.s32.totalorder %s233, %s249
      %p251 = scmp.eq.s32.totalorder %s29, 0
      %p252 = por %p250, %p251
      %p253 = scmp.le.s32.totalorder 1, %s23
      %p254 = scmp.lt.s32.totalorder %s23, 5
      %p255 = pnand %p253, %p254
      %p256 = pneg %p255
      // Predicated region
      $region9: #{tpu_custom_call.1} parent=5 // pred_check
        _
      $region10: #{tpu_custom_call.1} parent=5 // pred_check_branch
        %258 = sbr.rel (%p255) target = $region12
      $region11: #{tpu_custom_call.1} parent=5 // pred_region
        %s259 = ssub.s32 %s23, 1
        // Predicated region
        $region13: #{tpu_custom_call.1} parent=11 // pred_check
          %p260 = pneg %p61
        $region14: #{tpu_custom_call.1} parent=11 // pred_check_branch
          %262 = sbr.rel (%p260) target = $region16
        $region15: #{tpu_custom_call.1} parent=11 // pred_region
          %s264 = ssub.s32 64, 64
          %265 = vsyncadd [#allocation3], %s264
          %s266 = smul.addr %s32, 64
          %s267 = scalar_lea.hbm %s0, %s266
          %s269 = sshll.u32 [#allocation2], 4
          %s270 = int_to_ptr.vmem [resolvable:$true] %s269
          %272 = dma.hbm_to_vmem [thread:$0]  %s267, 64, %s270, [#allocation3]
        $region16: #{tpu_custom_call.1} parent=11 // pred_fallthru
          _
      $region12: #{tpu_custom_call.1} parent=5 // pred_fallthru
        _
      %p273 = scmp.lt.s32.totalorder %s23, 4
      // Predicated region
      $region17: #{tpu_custom_call.1} parent=5 // pred_check
        %p274 = pneg %p273
      $region18: #{tpu_custom_call.1} parent=5 // pred_check_branch
        %276 = sbr.rel (%p274) target = $region20
      $region19: #{tpu_custom_call.1} parent=5 // pred_region
        // Predicated region
        $region21: #{tpu_custom_call.1} parent=19 // pred_check
          %p277 = pneg %p81
        $region22: #{tpu_custom_call.1} parent=19 // pred_check_branch
          %279 = sbr.rel (%p277) target = $region24
        $region23: #{tpu_custom_call.1} parent=19 // pred_region
          %s280 = sand.u32 %s23, 1
          %s281 = scalar_lea.sflag [#allocation6], %s280
          %s282 = sand.u32 %s71, 1
          %s283 = smul.addr %s282, 64
          %s284 = scalar_lea.vmem [#allocation5], %s283
          %s286 = ssub.s32 1024, 1024
          %287 = vsyncadd %s281, %s286
          %s288 = smul.addr %s31, 16
          %s289 = smul.addr %s288, 64
          %s290 = scalar_lea.hbm %s1, %s289
          %s291 = sshll.u32 %s284, 4
          %s292 = int_to_ptr.vmem [resolvable:$true] %s291
          %297 = dma.hbm_to_vmem [thread:$0]  %s290, 1024, %s292, %s281, 64, 64, 4
        $region24: #{tpu_custom_call.1} parent=19 // pred_fallthru
          _
        // Predicated region
        $region25: #{tpu_custom_call.1} parent=19 // pred_check
          %p298 = pneg %p107
        $region26: #{tpu_custom_call.1} parent=19 // pred_check_branch
          %300 = sbr.rel (%p298) target = $region28
        $region27: #{tpu_custom_call.1} parent=19 // pred_region
          %p301 = scmp.lt.s32.totalorder %s31, 3
          %s302 = scalar_select %p301, %s31, 3
          %s303 = scalar_lea.vmem %s2, %s302
        $region28: #{tpu_custom_call.1} parent=19 // pred_fallthru
          _
        // Predicated region
        $region29: #{tpu_custom_call.1} parent=19 // pred_check
          %p304 = pneg %p133
        $region30: #{tpu_custom_call.1} parent=19 // pred_check_branch
          %306 = sbr.rel (%p304) target = $region32
        $region31: #{tpu_custom_call.1} parent=19 // pred_region
          %s307 = sand.u32 %s23, 1
          %s308 = scalar_lea.sflag [#allocation6], %s307
          %s309 = sand.u32 %s123, 1
          %s310 = smul.addr %s309, 64
          %s311 = scalar_lea.vmem [#allocation7], %s310
          %s313 = ssub.s32 1024, 1024
          %314 = vsyncadd %s308, %s313
          %s315 = smul.addr %s31, 16
          %s316 = smul.addr %s315, 64
          %s317 = scalar_lea.hbm %s3, %s316
          %s318 = sshll.u32 %s311, 4
          %s319 = int_to_ptr.vmem [resolvable:$true] %s318
          %324 = dma.hbm_to_vmem [thread:$0]  %s317, 1024, %s319, %s308, 64, 64, 4
        $region32: #{tpu_custom_call.1} parent=19 // pred_fallthru
          _
        // Predicated region
        $region33: #{tpu_custom_call.1} parent=19 // pred_check
          %p325 = pneg %p159
        $region34: #{tpu_custom_call.1} parent=19 // pred_check_branch
          %327 = sbr.rel (%p325) target = $region36
        $region35: #{tpu_custom_call.1} parent=19 // pred_region
          %p328 = scmp.lt.s32.totalorder %s31, 3
          %s329 = scalar_select %p328, %s31, 3
          %s330 = scalar_lea.vmem %s4, %s329
        $region36: #{tpu_custom_call.1} parent=19 // pred_fallthru
          _
        // Predicated region
        $region37: #{tpu_custom_call.1} parent=19 // pred_check
          %p331 = pneg %p185
        $region38: #{tpu_custom_call.1} parent=19 // pred_check_branch
          %333 = sbr.rel (%p331) target = $region40
        $region39: #{tpu_custom_call.1} parent=19 // pred_region
          %s334 = sand.u32 %s175, 1
          %s335 = scalar_lea.sflag [#allocation9], %s334
          %s336 = sand.u32 %s175, 1
          %s337 = smul.addr %s336, 64
          %s338 = scalar_lea.vmem [#allocation8], %s337
          %s340 = ssub.s32 1024, 1024
          %341 = vsyncadd %s335, %s340
          %s342 = smul.addr %s31, 16
          %s343 = smul.addr %s342, 64
          %s344 = scalar_lea.hbm %s5, %s343
          %s345 = sshll.u32 %s338, 4
          %s346 = int_to_ptr.vmem [resolvable:$true] %s345
          %351 = dma.hbm_to_vmem [thread:$0]  %s344, 1024, %s346, %s335, 64, 64, 4
        $region40: #{tpu_custom_call.1} parent=19 // pred_fallthru
          _
        // Predicated region
        $region41: #{tpu_custom_call.1} parent=19 // pred_check
          %p352 = pneg %p211
        $region42: #{tpu_custom_call.1} parent=19 // pred_check_branch
          %354 = sbr.rel (%p352) target = $region44
        $region43: #{tpu_custom_call.1} parent=19 // pred_region
          %p355 = scmp.lt.s32.totalorder %s31, 3
          %s356 = scalar_select %p355, %s31, 3
          %s357 = scalar_lea.vmem %s6, %s356
        $region44: #{tpu_custom_call.1} parent=19 // pred_fallthru
          _
      $region20: #{tpu_custom_call.1} parent=5 // pred_fallthru
        _
      %p358 = scmp.le.s32.totalorder 1, %s23
      %p359 = scmp.lt.s32.totalorder %s23, 5
      %p360 = pnand %p358, %p359
      %p361 = pneg %p360
      // Predicated region
      $region45: #{tpu_custom_call.1} parent=5 // pred_check
        _
      $region46: #{tpu_custom_call.1} parent=5 // pred_check_branch
        %363 = sbr.rel (%p360) target = $region48
      $region47: #{tpu_custom_call.1} parent=5 // pred_region
        %s364 = ssub.s32 %s23, 1
        // Predicated region
        $region49: #{tpu_custom_call.1} parent=47 // pred_check
          %p365 = pneg %p61
        $region50: #{tpu_custom_call.1} parent=47 // pred_check_branch
          %367 = sbr.rel (%p365) target = $region52
        $region51: #{tpu_custom_call.1} parent=47 // pred_region
          %368 = dma.done [#allocation3], 64
        $region52: #{tpu_custom_call.1} parent=47 // pred_fallthru
          _
        %s369 = sand.u32 %s28, 1
        %s370 = scalar_lea.sflag [#allocation6], %s369
        %s371 = sand.u32 %s74, 1
        %s372 = smul.addr %s371, 64
        %s373 = scalar_lea.vmem [#allocation5], %s372
        // Predicated region
        $region53: #{tpu_custom_call.1} parent=47 // pred_check
          %p374 = pneg %p87
        $region54: #{tpu_custom_call.1} parent=47 // pred_check_branch
          %376 = sbr.rel (%p374) target = $region56
        $region55: #{tpu_custom_call.1} parent=47 // pred_region
          %377 = dma.done %s370, 1024
        $region56: #{tpu_custom_call.1} parent=47 // pred_fallthru
          _
        %s378 = sand.u32 %s28, 1
        %s379 = scalar_lea.sflag [#allocation6], %s378
        %s380 = sand.u32 %s126, 1
        %s381 = smul.addr %s380, 64
        %s382 = scalar_lea.vmem [#allocation7], %s381
        // Predicated region
        $region57: #{tpu_custom_call.1} parent=47 // pred_check
          %p383 = pneg %p139
        $region58: #{tpu_custom_call.1} parent=47 // pred_check_branch
          %385 = sbr.rel (%p383) target = $region60
        $region59: #{tpu_custom_call.1} parent=47 // pred_region
          %386 = dma.done %s379, 1024
        $region60: #{tpu_custom_call.1} parent=47 // pred_fallthru
          _
        %s387 = sand.u32 %s178, 1
        %s388 = scalar_lea.sflag [#allocation9], %s387
        %s389 = sand.u32 %s178, 1
        %s390 = smul.addr %s389, 64
        %s391 = scalar_lea.vmem [#allocation8], %s390
        // Predicated region
        $region61: #{tpu_custom_call.1} parent=47 // pred_check
          %p392 = pneg %p191
        $region62: #{tpu_custom_call.1} parent=47 // pred_check_branch
          %394 = sbr.rel (%p392) target = $region64
        $region63: #{tpu_custom_call.1} parent=47 // pred_region
          %395 = dma.done %s388, 1024
        $region64: #{tpu_custom_call.1} parent=47 // pred_fallthru
          _
        %p396 = pneg %p61
        %p397 = pneg %p58
        %s398 = sand.u32 %s28, 1
        %s399 = scalar_lea.sflag [#allocation6], %s398
        %s400 = sand.u32 %s74, 1
        %s401 = smul.addr %s400, 64
        %s402 = scalar_lea.vmem [#allocation5], %s401
        %p403 = pneg %p87
        %p404 = pneg %p84
        %p405 = scmp.lt.s32.totalorder %s33, 3
        %s406 = scalar_select %p405, %s33, 3
        %s407 = scalar_lea.vmem %s2, %s406
        %p408 = pneg %p113
        %p409 = pneg %p110
        %s410 = sand.u32 %s28, 1
        %s411 = scalar_lea.sflag [#allocation6], %s410
        %s412 = sand.u32 %s126, 1
        %s413 = smul.addr %s412, 64
        %s414 = scalar_lea.vmem [#allocation7], %s413
        %p415 = pneg %p139
        %p416 = pneg %p136
        %p417 = scmp.lt.s32.totalorder %s33, 3
        %s418 = scalar_select %p417, %s33, 3
        %s419 = scalar_lea.vmem %s4, %s418
        %p420 = pneg %p165
        %p421 = pneg %p162
        %s422 = sand.u32 %s178, 1
        %s423 = scalar_lea.sflag [#allocation9], %s422
        %s424 = sand.u32 %s178, 1
        %s425 = smul.addr %s424, 64
        %s426 = scalar_lea.vmem [#allocation8], %s425
        %p427 = pneg %p191
        %p428 = pneg %p188
        %p429 = scmp.lt.s32.totalorder %s33, 3
        %s430 = scalar_select %p429, %s33, 3
        %s431 = scalar_lea.vmem %s6, %s430
        %p432 = pneg %p217
        %p433 = pneg %p214
        %p434 = pneg %p245
        %p435 = pneg %p242
        %s436 = sand.u32 %s232, 1
        %s437 = scalar_lea.sflag [#allocation4], %s436
        %s438 = sand.u32 %s232, 1
        %s439 = smul.addr %s438, 8
        %s440 = scalar_lea.vmem [#allocation10], %s439
        %p441 = scmp.lt.s32.totalorder %s33, 3
        %s442 = scalar_select %p441, %s33, 3
        %s443 = scalar_lea.vmem %s2, %s442
        %p444 = scmp.lt.s32.totalorder %s33, 3
        %s445 = scalar_select %p444, %s33, 3
        %s446 = scalar_lea.vmem %s4, %s445
        %p447 = scmp.lt.s32.totalorder %s33, 3
        %s448 = scalar_select %p447, %s33, 3
        %s449 = scalar_lea.vmem %s6, %s448
        %v451 = vld [vmem:[#allocation2] sm:$0xf]
        %v452 = vld [vmem:[%s373] sm:$0xf]
        %v453 = vld [vmem:[%s373 + $0x4] sm:$0xf]
        %v454 = vld [vmem:[%s373 + $0x8] sm:$0xf]
        %v455 = vld [vmem:[%s373 + $0xc] sm:$0xf]
        %v456 = vld [vmem:[%s373 + $0x10] sm:$0xf]
        %v457 = vld [vmem:[%s373 + $0x14] sm:$0xf]
        %v458 = vld [vmem:[%s373 + $0x18] sm:$0xf]
        %v459 = vld [vmem:[%s373 + $0x1c] sm:$0xf]
        %v460 = vld [vmem:[%s373 + $0x20] sm:$0xf]
        %v461 = vld [vmem:[%s373 + $0x24] sm:$0xf]
        %v462 = vld [vmem:[%s373 + $0x28] sm:$0xf]
        %v463 = vld [vmem:[%s373 + $0x2c] sm:$0xf]
        %v464 = vld [vmem:[%s373 + $0x30] sm:$0xf]
        %v465 = vld [vmem:[%s373 + $0x34] sm:$0xf]
        %v466 = vld [vmem:[%s373 + $0x38] sm:$0xf]
        %v467 = vld [vmem:[%s373 + $0x3c] sm:$0xf]
        %v468 = vld [vmem:[%s443] sm:$0x1]
        %v470 = vlaneseq
        %v471 = vshrl.u32 %v470, 7
        %v472 = vsub.s32 0, %v471
        %v473 = vrot.slane %v468, %v472
        %v491 = vunpack.c.l.b16 %v452
        %v492 = vunpack.c.l.b16 %v453
        %v493 = vunpack.c.l.b16 %v454
        %v494 = vunpack.c.l.b16 %v455
        %v495 = vunpack.c.l.b16 %v456
        %v496 = vunpack.c.l.b16 %v457
        %v497 = vunpack.c.l.b16 %v458
        %v498 = vunpack.c.l.b16 %v459
        %v499 = vunpack.c.l.b16 %v460
        %v500 = vunpack.c.l.b16 %v461
        %v501 = vunpack.c.l.b16 %v462
        %v502 = vunpack.c.l.b16 %v463
        %v503 = vunpack.c.l.b16 %v464
        %v504 = vunpack.c.l.b16 %v465
        %v505 = vunpack.c.l.b16 %v466
        %v506 = vunpack.c.l.b16 %v467
        %v507 = vpack.c.b16 %v492, %v491
        %v508 = vpack.c.b16 %v494, %v493
        %v509 = vpack.c.b16 %v496, %v495
        %v510 = vpack.c.b16 %v498, %v497
        %v511 = vpack.c.b16 %v500, %v499
        %v512 = vpack.c.b16 %v502, %v501
        %v513 = vpack.c.b16 %v504, %v503
        %v514 = vpack.c.b16 %v506, %v505
        %523 = vmatprep.subr.bf16.mxu0 0
        %524 = vmatpush1.bf16.msra.mxu0 %v507
        %525 = vmatprep.subr.bf16.mxu0 0
        %526 = vmatpush1.bf16.msra.mxu0 %v508
        %527 = vmatprep.subr.bf16.mxu0 0
        %528 = vmatpush1.bf16.msra.mxu0 %v509
        %529 = vmatprep.subr.bf16.mxu0 0
        %530 = vmatpush1.bf16.msra.mxu0 %v510
        %531 = vmatprep.subr.bf16.mxu0 0
        %532 = vmatpush1.bf16.msra.mxu0 %v511
        %533 = vmatprep.subr.bf16.mxu0 0
        %534 = vmatpush1.bf16.msra.mxu0 %v512
        %535 = vmatprep.subr.bf16.mxu0 0
        %536 = vmatpush1.bf16.msra.mxu0 %v513
        %537 = vmatprep.subr.bf16.mxu0 0
        %538 = vmatpush1.bf16.msra.mxu0 %v514
        %539 = vmatprep.subr.bf16.mxu0 0
        %540 = vmatpush1.bf16.msra.mxu0 0
        %541 = vmatprep.subr.bf16.mxu0 0
        %542 = vmatpush1.bf16.msra.mxu0 0
        %543 = vmatprep.subr.bf16.mxu0 0
        %544 = vmatpush1.bf16.msra.mxu0 0
        %545 = vmatprep.subr.bf16.mxu0 0
        %546 = vmatpush1.bf16.msra.mxu0 0
        %547 = vmatprep.subr.bf16.mxu0 0
        %548 = vmatpush1.bf16.msra.mxu0 0
        %549 = vmatprep.subr.bf16.mxu0 0
        %550 = vmatpush1.bf16.msra.mxu0 0
        %551 = vmatprep.subr.bf16.mxu0 0
        %552 = vmatpush1.bf16.msra.mxu0 0
        %553 = vmatprep.subr.bf16.mxu0 0
        %554 = vmatpush1.bf16.msra.mxu0 0
        %555 = vmatprep.mubr.bf16.mxu0 0
        %556 = vmatmul.mubr.bf16.gmra.mrb[0].mxu0 %v451
        %v557 = vpop.f32.mrb[0].mxu0
        %v558 = vadd.f32 %v473, %v557
        %v559 = vpop.f32.mrb[0].mxu0
        %v560 = vpop.f32.mrb[0].mxu0
        %v561 = vpop.f32.mrb[0].mxu0
        %562 = vdwg.mxu0
        %v563 = vxor.u32 %v558, 2147483648
        %v564 = vmul.f32 %v563, 1.442695
        %v565 = vpow.pop %v564
        %v566 = vadd.f32 %v565, 1.0
        %v567 = vrcp.pop %v566
        %v568 = vmul.f32 1.0, %v567
        %v569 = vmul.f32 %v558, %v568
        %v570 = vpack.c.bf16 %v569, %v569
        %v571 = vld [vmem:[%s382] sm:$0xf]
        %v572 = vld [vmem:[%s382 + $0x4] sm:$0xf]
        %v573 = vld [vmem:[%s382 + $0x8] sm:$0xf]
        %v574 = vld [vmem:[%s382 + $0xc] sm:$0xf]
        %v575 = vld [vmem:[%s382 + $0x10] sm:$0xf]
        %v576 = vld [vmem:[%s382 + $0x14] sm:$0xf]
        %v577 = vld [vmem:[%s382 + $0x18] sm:$0xf]
        %v578 = vld [vmem:[%s382 + $0x1c] sm:$0xf]
        %v579 = vld [vmem:[%s382 + $0x20] sm:$0xf]
        %v580 = vld [vmem:[%s382 + $0x24] sm:$0xf]
        %v581 = vld [vmem:[%s382 + $0x28] sm:$0xf]
        %v582 = vld [vmem:[%s382 + $0x2c] sm:$0xf]
        %v583 = vld [vmem:[%s382 + $0x30] sm:$0xf]
        %v584 = vld [vmem:[%s382 + $0x34] sm:$0xf]
        %v585 = vld [vmem:[%s382 + $0x38] sm:$0xf]
        %v586 = vld [vmem:[%s382 + $0x3c] sm:$0xf]
        %v587 = vld [vmem:[%s446] sm:$0x1]
        %v589 = vlaneseq
        %v590 = vshrl.u32 %v589, 7
        %v591 = vsub.s32 0, %v590
        %v592 = vrot.slane %v587, %v591
        %v610 = vunpack.c.l.b16 %v571
        %v611 = vunpack.c.l.b16 %v572
        %v612 = vunpack.c.l.b16 %v573
        %v613 = vunpack.c.l.b16 %v574
        %v614 = vunpack.c.l.b16 %v575
        %v615 = vunpack.c.l.b16 %v576
        %v616 = vunpack.c.l.b16 %v577
        %v617 = vunpack.c.l.b16 %v578
        %v618 = vunpack.c.l.b16 %v579
        %v619 = vunpack.c.l.b16 %v580
        %v620 = vunpack.c.l.b16 %v581
        %v621 = vunpack.c.l.b16 %v582
        %v622 = vunpack.c.l.b16 %v583
        %v623 = vunpack.c.l.b16 %v584
        %v624 = vunpack.c.l.b16 %v585
        %v625 = vunpack.c.l.b16 %v586
        %v626 = vpack.c.b16 %v611, %v610
        %v627 = vpack.c.b16 %v613, %v612
        %v628 = vpack.c.b16 %v615, %v614
        %v629 = vpack.c.b16 %v617, %v616
        %v630 = vpack.c.b16 %v619, %v618
        %v631 = vpack.c.b16 %v621, %v620
        %v632 = vpack.c.b16 %v623, %v622
        %v633 = vpack.c.b16 %v625, %v624
        %642 = vmatprep.subr.bf16.mxu0 0
        %643 = vmatpush1.bf16.msra.mxu0 %v626
        %644 = vmatprep.subr.bf16.mxu0 0
        %645 = vmatpush1.bf16.msra.mxu0 %v627
        %646 = vmatprep.subr.bf16.mxu0 0
        %647 = vmatpush1.bf16.msra.mxu0 %v628
        %648 = vmatprep.subr.bf16.mxu0 0
        %649 = vmatpush1.bf16.msra.mxu0 %v629
        %650 = vmatprep.subr.bf16.mxu0 0
        %651 = vmatpush1.bf16.msra.mxu0 %v630
        %652 = vmatprep.subr.bf16.mxu0 0
        %653 = vmatpush1.bf16.msra.mxu0 %v631
        %654 = vmatprep.subr.bf16.mxu0 0
        %655 = vmatpush1.bf16.msra.mxu0 %v632
        %656 = vmatprep.subr.bf16.mxu0 0
        %657 = vmatpush1.bf16.msra.mxu0 %v633
        %658 = vmatprep.subr.bf16.mxu0 0
        %659 = vmatpush1.bf16.msra.mxu0 0
        %660 = vmatprep.subr.bf16.mxu0 0
        %661 = vmatpush1.bf16.msra.mxu0 0
        %662 = vmatprep.subr.bf16.mxu0 0
        %663 = vmatpush1.bf16.msra.mxu0 0
        %664 = vmatprep.subr.bf16.mxu0 0
        %665 = vmatpush1.bf16.msra.mxu0 0
        %666 = vmatprep.subr.bf16.mxu0 0
        %667 = vmatpush1.bf16.msra.mxu0 0
        %668 = vmatprep.subr.bf16.mxu0 0
        %669 = vmatpush1.bf16.msra.mxu0 0
        %670 = vmatprep.subr.bf16.mxu0 0
        %671 = vmatpush1.bf16.msra.mxu0 0
        %672 = vmatprep.subr.bf16.mxu0 0
        %673 = vmatpush1.bf16.msra.mxu0 0
        %674 = vmatprep.mubr.bf16.mxu0 0
        %675 = vmatmul.mubr.bf16.gmra.mrb[0].mxu0 %v570
        %v676 = vpop.f32.mrb[0].mxu0
        %v677 = vadd.f32 %v592, %v676
        %v678 = vpop.f32.mrb[0].mxu0
        %v679 = vpop.f32.mrb[0].mxu0
        %v680 = vpop.f32.mrb[0].mxu0
        %681 = vdwg.mxu0
        %v682 = vxor.u32 %v677, 2147483648
        %v683 = vmul.f32 %v682, 1.442695
        %v684 = vpow.pop %v683
        %v685 = vadd.f32 %v684, 1.0
        %v686 = vrcp.pop %v685
        %v687 = vmul.f32 1.0, %v686
        %v688 = vmul.f32 %v677, %v687
        %v689 = vpack.c.bf16 %v688, %v688
        %v690 = vld [vmem:[%s391] sm:$0xf]
        %v691 = vld [vmem:[%s391 + $0x4] sm:$0xf]
        %v692 = vld [vmem:[%s391 + $0x8] sm:$0xf]
        %v693 = vld [vmem:[%s391 + $0xc] sm:$0xf]
        %v694 = vld [vmem:[%s391 + $0x10] sm:$0xf]
        %v695 = vld [vmem:[%s391 + $0x14] sm:$0xf]
        %v696 = vld [vmem:[%s391 + $0x18] sm:$0xf]
        %v697 = vld [vmem:[%s391 + $0x1c] sm:$0xf]
        %v698 = vld [vmem:[%s391 + $0x20] sm:$0xf]
        %v699 = vld [vmem:[%s391 + $0x24] sm:$0xf]
        %v700 = vld [vmem:[%s391 + $0x28] sm:$0xf]
        %v701 = vld [vmem:[%s391 + $0x2c] sm:$0xf]
        %v702 = vld [vmem:[%s391 + $0x30] sm:$0xf]
        %v703 = vld [vmem:[%s391 + $0x34] sm:$0xf]
        %v704 = vld [vmem:[%s391 + $0x38] sm:$0xf]
        %v705 = vld [vmem:[%s391 + $0x3c] sm:$0xf]
        %v706 = vld [vmem:[%s449] sm:$0x1]
        %v708 = vlaneseq
        %v709 = vshrl.u32 %v708, 7
        %v710 = vsub.s32 0, %v709
        %v711 = vrot.slane %v706, %v710
        %v729 = vunpack.c.l.b16 %v690
        %v730 = vunpack.c.l.b16 %v691
        %v731 = vunpack.c.l.b16 %v692
        %v732 = vunpack.c.l.b16 %v693
        %v733 = vunpack.c.l.b16 %v694
        %v734 = vunpack.c.l.b16 %v695
        %v735 = vunpack.c.l.b16 %v696
        %v736 = vunpack.c.l.b16 %v697
        %v737 = vunpack.c.l.b16 %v698
        %v738 = vunpack.c.l.b16 %v699
        %v739 = vunpack.c.l.b16 %v700
        %v740 = vunpack.c.l.b16 %v701
        %v741 = vunpack.c.l.b16 %v702
        %v742 = vunpack.c.l.b16 %v703
        %v743 = vunpack.c.l.b16 %v704
        %v744 = vunpack.c.l.b16 %v705
        %v745 = vpack.c.b16 %v730, %v729
        %v746 = vpack.c.b16 %v732, %v731
        %v747 = vpack.c.b16 %v734, %v733
        %v748 = vpack.c.b16 %v736, %v735
        %v749 = vpack.c.b16 %v738, %v737
        %v750 = vpack.c.b16 %v740, %v739
        %v751 = vpack.c.b16 %v742, %v741
        %v752 = vpack.c.b16 %v744, %v743
        %761 = vmatprep.subr.bf16.mxu0 0
        %762 = vmatpush1.bf16.msra.mxu0 %v745
        %763 = vmatprep.subr.bf16.mxu0 0
        %764 = vmatpush1.bf16.msra.mxu0 %v746
        %765 = vmatprep.subr.bf16.mxu0 0
        %766 = vmatpush1.bf16.msra.mxu0 %v747
        %767 = vmatprep.subr.bf16.mxu0 0
        %768 = vmatpush1.bf16.msra.mxu0 %v748
        %769 = vmatprep.subr.bf16.mxu0 0
        %770 = vmatpush1.bf16.msra.mxu0 %v749
        %771 = vmatprep.subr.bf16.mxu0 0
        %772 = vmatpush1.bf16.msra.mxu0 %v750
        %773 = vmatprep.subr.bf16.mxu0 0
        %774 = vmatpush1.bf16.msra.mxu0 %v751
        %775 = vmatprep.subr.bf16.mxu0 0
        %776 = vmatpush1.bf16.msra.mxu0 %v752
        %777 = vmatprep.subr.bf16.mxu0 0
        %778 = vmatpush1.bf16.msra.mxu0 0
        %779 = vmatprep.subr.bf16.mxu0 0
        %780 = vmatpush1.bf16.msra.mxu0 0
        %781 = vmatprep.subr.bf16.mxu0 0
        %782 = vmatpush1.bf16.msra.mxu0 0
        %783 = vmatprep.subr.bf16.mxu0 0
        %784 = vmatpush1.bf16.msra.mxu0 0
        %785 = vmatprep.subr.bf16.mxu0 0
        %786 = vmatpush1.bf16.msra.mxu0 0
        %787 = vmatprep.subr.bf16.mxu0 0
        %788 = vmatpush1.bf16.msra.mxu0 0
        %789 = vmatprep.subr.bf16.mxu0 0
        %790 = vmatpush1.bf16.msra.mxu0 0
        %791 = vmatprep.subr.bf16.mxu0 0
        %792 = vmatpush1.bf16.msra.mxu0 0
        %793 = vmatprep.mubr.bf16.mxu0 0
        %794 = vmatmul.mubr.bf16.gmra.mrb[0].mxu0 %v689
        %v795 = vpop.f32.mrb[0].mxu0
        %v796 = vadd.f32 %v711, %v795
        %v797 = vpop.f32.mrb[0].mxu0
        %v798 = vpop.f32.mrb[0].mxu0
        %v799 = vpop.f32.mrb[0].mxu0
        %800 = vdwg.mxu0
        %801 = vst [vmem:[%s440] sm:$0xff] %v796
        %s802 = sand.u32 %s232, 1
        %s803 = scalar_lea.sflag [#allocation4], %s802
        %s804 = sand.u32 %s232, 1
        %s805 = smul.addr %s804, 8
        %s806 = scalar_lea.vmem [#allocation10], %s805
        // Predicated region
        $region65: #{tpu_custom_call.1} parent=47 // pred_check
          %p807 = pneg %p242
        $region66: #{tpu_custom_call.1} parent=47 // pred_check_branch
          %809 = sbr.rel (%p807) target = $region68
        $region67: #{tpu_custom_call.1} parent=47 // pred_region
          %s811 = ssub.s32 128, 128
          %812 = vsyncadd %s803, %s811
          %s813 = sadd.s32 %s32, %s33
          %s814 = smul.addr %s813, 128
          %s815 = scalar_lea.hbm %s7, %s814
          %s817 = sshll.u32 %s806, 4
          %s818 = int_to_ptr.vmem [resolvable:$true] %s817
          %820 = dma.vmem_to_hbm [thread:$0]  %s818, 128, %s815, %s803
        $region68: #{tpu_custom_call.1} parent=47 // pred_fallthru
          _
      $region48: #{tpu_custom_call.1} parent=5 // pred_fallthru
        _
      %p821 = scmp.le.s32.totalorder 2, %s23
      // Predicated region
      $region69: #{tpu_custom_call.1} parent=5 // pred_check
        %p822 = pneg %p821
      $region70: #{tpu_custom_call.1} parent=5 // pred_check_branch
        %824 = sbr.rel (%p822) target = $region72
      $region71: #{tpu_custom_call.1} parent=5 // pred_region
        %s825 = ssub.s32 %s23, 2
        // Predicated region
        $region73: #{tpu_custom_call.1} parent=71 // pred_check
          %p826 = pneg %p248
        $region74: #{tpu_custom_call.1} parent=71 // pred_check_branch
          %828 = sbr.rel (%p826) target = $region76
        $region75: #{tpu_custom_call.1} parent=71 // pred_region
          %s829 = sand.u32 %s233, 1
          %s830 = scalar_lea.sflag [#allocation4], %s829
          %s831 = sand.u32 %s233, 1
          %s832 = smul.addr %s831, 8
          %s833 = scalar_lea.vmem [#allocation10], %s832
          %834 = dma.done %s830, 128
        $region76: #{tpu_custom_call.1} parent=71 // pred_fallthru
          _
      $region72: #{tpu_custom_call.1} parent=5 // pred_fallthru
        _
    $region6: #{tpu_custom_call.1} parent=1 // loop_footer
      %s27 = sadd.s32 1, %s23
    $region7: #{tpu_custom_call.1} parent=1 // loop_footer_branch
      %22 = sbr.rel target = $region3
    $region8: #{tpu_custom_call.1} parent=1 // loop_exit
      _
    %835 = vsyncpa [#allocation3], 1
    %s836 = scalar_lea.sflag [#allocation3], 1
    %837 = vsyncpa %s836, 1
    %838 = vsyncpa [#allocation6], 1
    %s839 = scalar_lea.sflag [#allocation6], 1
    %840 = vsyncpa %s839, 1
    %841 = vsyncpa [#allocation9], 1
    %s842 = scalar_lea.sflag [#allocation9], 1
    %843 = vsyncpa %s842, 1
    %844 = vsyncpa [#allocation4], 1
    %s845 = scalar_lea.sflag [#allocation4], 1
    %846 = vsyncpa %s845, 1

</llo_original>
